<compile_context>
chip_gen: v5e
topology: v5e:2x2
jax: 0.10.0
libtpu: 0.0.40
codegen_flags: <defaults>
</compile_context>

<pallas_src>
import functools

import jax
import jax.numpy as jnp
from jax.experimental import pallas as pl
from jax.experimental.pallas import tpu as pltpu

EPS = 1e-5


def _round_up(x, m):
    return ((x + m - 1) // m) * m


def _vmem_capacity_bytes():
    try:
        return int(pltpu.get_tpu_info().vmem_capacity_bytes)
    except Exception:
        return 64 * 1024 * 1024  # conservative fallback (v7x per-TC capacity)


# ---------------------------------------------------------------------------
# Kernels
# ---------------------------------------------------------------------------
def _bn_epilogue(y, n_actual, n_pad, out_dtype):
    """bias/ReLU already applied; mask padded batch rows, then BatchNorm1d stats."""
    if n_actual != n_pad:  # static
        row = jax.lax.broadcasted_iota(jnp.int32, y.shape, 0)
        y = jnp.where(row < n_actual, y, 0.0)
    inv_n = jnp.float32(1.0 / n_actual)            # multiply, not divide
    mean = jnp.sum(y, axis=0, keepdims=True) * inv_n
    ex2 = jnp.sum(y * y, axis=0, keepdims=True) * inv_n
    var = jnp.maximum(ex2 - mean * mean, 0.0)      # biased var, clamp tiny negatives
    return ((y - mean) * jax.lax.rsqrt(var + EPS)).astype(out_dtype)


def _mlp_block_kernel_1k(x_ref, w_ref, b_ref, o_ref, *, n_actual, n_pad):
    """Single K step: fully fused dot -> bias -> ReLU -> BN, no accumulator revisits."""
    y = jnp.dot(x_ref[...], w_ref[...], preferred_element_type=jnp.float32)
    y = jnp.maximum(y + b_ref[...], 0.0)
    o_ref[...] = _bn_epilogue(y, n_actual, n_pad, o_ref.dtype)


def _mlp_block_kernel_mk(x_ref, w_ref, b_ref, o_ref, *, n_actual, n_pad):
    """Multiple K steps: accumulate directly into the resident f32 output block."""
    k = pl.program_id(1)

    @pl.when(k == 0)
    def _init():
        o_ref[...] = jnp.zeros_like(o_ref)

    o_ref[...] += jnp.dot(x_ref[...], w_ref[...],
                          preferred_element_type=jnp.float32)

    @pl.when(k == pl.num_programs(1) - 1)
    def _finalize():
        y = jnp.maximum(o_ref[...] + b_ref[...], 0.0)
        o_ref[...] = _bn_epilogue(y, n_actual, n_pad, o_ref.dtype)


# ---------------------------------------------------------------------------
# Tile selection (generation aware)
# ---------------------------------------------------------------------------
def _select_tiles(n_p, in_base, out_base, cap, tk_cap=None):
    tn_max = 512 if cap >= (100 << 20) else 256          # 128-MiB parts take bigger tn
    tile_budget = cap // 2 - (2 << 20)                   # leave headroom under scoped VMEM

    # Feature tile: 128-multiple divisor of out_base (no extra padding waste).
    tn_cands = [d for d in range(128, out_base + 1, 128)
                if out_base % d == 0 and d <= tn_max] or [128]
    tn = tn_cands[-1]
    if out_base >= 256:
        # >=2 feature tiles so both v7x TensorCores get work on the "parallel" axis.
        multi = [d for d in tn_cands if out_base // d >= 2]
        if multi:
            tn = multi[-1]

    def footprint(tk, tn_):
        return (2 * n_p * tk * 2        # x tiles, bf16, double-buffered
                + 2 * tk * tn_ * 2      # W tiles, bf16, double-buffered
                + 2 * tn_ * 4           # bias tiles
                + 2 * n_p * tn_ * 4)    # f32 output block (accumulator), double-buffered

    # Shrink the feature tile if even tk=128 does not fit the budget (large batch).
    while footprint(128, tn) > tile_budget and tn > 128:
        smaller = [d for d in tn_cands if d < tn]
        if not smaller:
            break
        tn = smaller[-1]

    # K tile: 128-multiple divisor of in_base; prefer the whole reduction in one step.
    tk_limit = in_base if tk_cap is None else min(in_base, max(128, tk_cap))
    tk_cands = [d for d in range(128, in_base + 1, 128)
                if in_base % d == 0 and d <= tk_limit] or [128]
    tk = tk_cands[0]
    for d in tk_cands:                                   # ascending -> keep largest fit
        if footprint(d, tn) <= tile_budget:
            tk = d
    # TODO(synk): for very large N the untiled batch can still exceed VMEM; add a
    # two-pass BN (GEMM+ReLU+partial sums, then normalize) with an N-tiled grid.
    return tn, tk, footprint(tk, tn)


# ---------------------------------------------------------------------------
# Wrappers
# ---------------------------------------------------------------------------
def _pad_cast_2d(a, rows, cols, dtype):
    """Pad/cast only when needed (no-op if already aligned to the target shape/dtype)."""
    if a.shape == (rows, cols):
        return a if a.dtype == dtype else a.astype(dtype)
    out = jnp.zeros((rows, cols), dtype)
    return out.at[:a.shape[0], :a.shape[1]].set(a.astype(dtype))


def prepare_weights(w, b):
    """Pad/cast Linear parameters once, outside the per-call hot path.

    w: (inplane, outplane) f32, b: (outplane,) f32.
    Returns (w_p bf16 (in_base, out_base), b_p f32 (1, out_base), outplane).
    """
    inplane, outplane = w.shape
    in_base = _round_up(inplane, 128)
    out_base = _round_up(outplane, 128)
    w_p = _pad_cast_2d(w, in_base, out_base, jnp.bfloat16)
    b_p = _pad_cast_2d(b.reshape(1, -1), 1, out_base, jnp.float32)
    return w_p, b_p, outplane


def mlp_block_prepared(x, w_p, b_p, outplane, *, tk_cap=None):
    """x: (N, inplane) f32; w_p/b_p from prepare_weights().  Returns f32 (N, outplane)."""
    n, inplane = x.shape
    in_base, out_base = w_p.shape
    assert inplane <= in_base and outplane <= out_base

    n_p = _round_up(max(n, 1), 16)                 # bf16 x packs 16 sublanes / vreg
    cap = _vmem_capacity_bytes()
    tn, tk, fp = _select_tiles(n_p, in_base, out_base, cap, tk_cap)
    vmem_limit = int(min(cap * 3 // 4, max(fp + (4 << 20), 16 << 20)))

    x_p = _pad_cast_2d(x, n_p, in_base, jnp.bfloat16)

    out_tiles = out_base // tn
    k_tiles = in_base // tk

    if k_tiles == 1:
        kernel = functools.partial(_mlp_block_kernel_1k, n_actual=n, n_pad=n_p)
        grid = (out_tiles,)
        in_specs = [
            pl.BlockSpec((n_p, tk), lambda j: (0, 0)),   # x   (full batch, full K)
            pl.BlockSpec((tk, tn), lambda j: (0, j)),    # W   (full K, feature tile)
            pl.BlockSpec((1, tn), lambda j: (0, j)),     # bias (feature tile)
        ]
        out_specs = pl.BlockSpec((n_p, tn), lambda j: (0, j))
        dims = ("parallel",)
    else:
        kernel = functools.partial(_mlp_block_kernel_mk, n_actual=n, n_pad=n_p)
        grid = (out_tiles, k_tiles)                      # reduction axis last
        in_specs = [
            pl.BlockSpec((n_p, tk), lambda j, k: (0, k)),
            pl.BlockSpec((tk, tn), lambda j, k: (k, j)),
            pl.BlockSpec((1, tn), lambda j, k: (0, j)),
        ]
        out_specs = pl.BlockSpec((n_p, tn), lambda j, k: (0, j))
        dims = ("parallel", "arbitrary")

    out = pl.pallas_call(
        kernel,
        out_shape=jax.ShapeDtypeStruct((n_p, out_base), jnp.float32),
        grid_spec=pltpu.PrefetchScalarGridSpec(
            num_scalar_prefetch=0,
            grid=grid,
            in_specs=in_specs,
            out_specs=out_specs,
        ),
        compiler_params=pltpu.CompilerParams(
            dimension_semantics=dims,
            vmem_limit_bytes=vmem_limit,
        ),
    )(x_p, w_p, b_p)
    return out[:n, :outplane]


def mlp_block(x, w, b, *, tk_cap=None):
    """Convenience wrapper: x (N, inplane), w (inplane, outplane), b (outplane,)."""
    w_p, b_p, outplane = prepare_weights(w, b)
    return mlp_block_prepared(x, w_p, b_p, outplane, tk_cap=tk_cap)


# ---------------------------------------------------------------------------
# Reference + self-test
# ---------------------------------------------------------------------------
def reference_bf16(x, w, b):
    """Same bf16-operand / f32-accumulate matmul as the kernel, then ReLU + BN."""
    y = jnp.dot(x.astype(jnp.bfloat16), w.astype(jnp.bfloat16),
                preferred_element_type=jnp.float32) + b
    y = jnp.maximum(y, 0.0)
    mean = jnp.mean(y, axis=0, keepdims=True)
    var = jnp.mean((y - mean) ** 2, axis=0, keepdims=True)
    return (y - mean) / jnp.sqrt(var + EPS)


if __name__ == "__main__":
    def make_inputs(key, n, inplane, outplane):
        kx, kw, kb = jax.random.split(key, 3)
        x = jax.random.normal(kx, (n, inplane), dtype=jnp.float32)
        bound = 1.0 / (inplane ** 0.5)                   # mimic nn.Linear default init
        w = jax.random.uniform(kw, (inplane, outplane), dtype=jnp.float32,
                               minval=-bound, maxval=bound)
        b = jax.random.uniform(kb, (outplane,), dtype=jnp.float32,
                               minval=-bound, maxval=bound)
        return x, w, b

    # Case 1: MLPBlock(inplane=32, outplane=64), batch=8 (single-K fused path).
    x, w, b = make_inputs(jax.random.PRNGKey(0), 8, 32, 64)
    out = jax.block_until_ready(mlp_block(x, w, b))
    assert out.shape == (8, 64)
    assert jnp.max(jnp.abs(out - reference_bf16(x, w, b))) < 5e-3, "mismatch (small)"

    # Case 2: feature tiling with pre-prepared weights (single-K path, grid=(3,)).
    x2, w2, b2 = make_inputs(jax.random.PRNGKey(1), 64, 1024, 384)
    w2_p, b2_p, outplane2 = prepare_weights(w2, b2)       # pad/cast once, off hot path
    out2 = jax.block_until_ready(mlp_block_prepared(x2, w2_p, b2_p, outplane2))
    assert out2.shape == (64, 384)
    assert jnp.max(jnp.abs(out2 - reference_bf16(x2, w2, b2))) < 5e-3, "mismatch (tiled)"

    # Case 3: force K accumulation (grid=(3, 2)) to exercise the multi-K kernel.
    out3 = jax.block_until_ready(
        mlp_block_prepared(x2, w2_p, b2_p, outplane2, tk_cap=512))
    assert out3.shape == (64, 384)
    assert jnp.max(jnp.abs(out3 - reference_bf16(x2, w2, b2))) < 5e-3, "mismatch (multi-K)"

    print("KERNEL_OK")
</pallas_src>

<mosaic_0001>
module attributes {stable_mosaic.version = 11 : i64} {
  func.func @_mlp_block_kernel_1k(%arg0: i32, %arg1: memref<16x128xbf16, #tpu.memory_space<vmem>>, %arg2: memref<128x128xbf16, #tpu.memory_space<vmem>>, %arg3: memref<1x128xf32, #tpu.memory_space<vmem>>, %arg4: memref<16x128xf32, #tpu.memory_space<vmem>>) attributes {dimension_semantics = [#tpu.dimension_semantics<parallel>], iteration_bounds = array<i64: 1>, scalar_prefetch = 0 : i64, scratch_operands = 0 : i64, tpu.core_type = #tpu.core_type<tc>, window_params = [{pipeline_mode = #tpu.pipeline_mode<synchronous>, transform_indices = @transform_0, window_bounds = array<i64: 16, 128>}, {transform_indices = @transform_1, window_bounds = array<i64: 128, 128>}, {transform_indices = @transform_2, window_bounds = array<i64: 1, 128>}, {transform_indices = @transform_3, window_bounds = array<i64: 16, 128>}]} {
    %c0 = arith.constant 0 : index
    %c0_0 = arith.constant 0 : index
    %0 = vector.load %arg1[%c0, %c0_0] : memref<16x128xbf16, #tpu.memory_space<vmem>>, vector<16x128xbf16>
    %c0_1 = arith.constant 0 : index
    %c0_2 = arith.constant 0 : index
    %1 = vector.load %arg2[%c0_1, %c0_2] : memref<128x128xbf16, #tpu.memory_space<vmem>>, vector<128x128xbf16>
    %cst = arith.constant dense<0.000000e+00> : vector<16x128xf32>
    %2 = tpu.matmul %0, %1, %cst {dimension_numbers = #tpu.dot_dimension_numbers<[1], [0], [0], [1], [0, 0, 1, 1], [], []>} : vector<16x128xbf16>, vector<128x128xbf16>, vector<16x128xf32> -> vector<16x128xf32>
    %c0_3 = arith.constant 0 : index
    %c0_4 = arith.constant 0 : index
    %3 = vector.load %arg3[%c0_3, %c0_4] : memref<1x128xf32, #tpu.memory_space<vmem>>, vector<1x128xf32>
    %4 = vector.broadcast %3 : vector<1x128xf32> to vector<16x128xf32>
    %5 = arith.addf %2, %4 : vector<16x128xf32>
    %cst_5 = arith.constant 0.000000e+00 : f32
    %6 = vector.broadcast %cst_5 : f32 to vector<16x128xf32>
    %7 = arith.maximumf %5, %6 : vector<16x128xf32>
    %8 = tpu.iota {dimensions = array<i32: 0>} : vector<16x128xi32>
    %c8_i32 = arith.constant 8 : i32
    %9 = vector.broadcast %c8_i32 : i32 to vector<16x128xi32>
    %10 = arith.cmpi slt, %8, %9 : vector<16x128xi32>
    %cst_6 = arith.constant 0.000000e+00 : f32
    %11 = vector.broadcast %cst_6 : f32 to vector<16x128xf32>
    %12 = arith.select %10, %7, %11 : vector<16x128xi1>, vector<16x128xf32>
    %cst_7 = arith.constant dense<0.000000e+00> : vector<128xf32>
    %13 = vector.multi_reduction <add>, %12, %cst_7 [0] : vector<16x128xf32> to vector<128xf32>
    %14 = vector.shape_cast %13 : vector<128xf32> to vector<1x128xf32>
    %cst_8 = arith.constant 1.250000e-01 : f32
    %15 = vector.broadcast %cst_8 : f32 to vector<1x128xf32>
    %16 = arith.mulf %14, %15 : vector<1x128xf32>
    %17 = arith.mulf %12, %12 : vector<16x128xf32>
    %cst_9 = arith.constant dense<0.000000e+00> : vector<128xf32>
    %18 = vector.multi_reduction <add>, %17, %cst_9 [0] : vector<16x128xf32> to vector<128xf32>
    %19 = vector.shape_cast %18 : vector<128xf32> to vector<1x128xf32>
    %cst_10 = arith.constant 1.250000e-01 : f32
    %20 = vector.broadcast %cst_10 : f32 to vector<1x128xf32>
    %21 = arith.mulf %19, %20 : vector<1x128xf32>
    %22 = arith.mulf %16, %16 : vector<1x128xf32>
    %23 = arith.subf %21, %22 : vector<1x128xf32>
    %cst_11 = arith.constant 0.000000e+00 : f32
    %24 = vector.broadcast %cst_11 : f32 to vector<1x128xf32>
    %25 = arith.maximumf %23, %24 : vector<1x128xf32>
    %26 = vector.broadcast %16 : vector<1x128xf32> to vector<16x128xf32>
    %27 = arith.subf %12, %26 : vector<16x128xf32>
    %cst_12 = arith.constant 9.99999974E-6 : f32
    %28 = vector.broadcast %cst_12 : f32 to vector<1x128xf32>
    %29 = arith.addf %25, %28 : vector<1x128xf32>
    %30 = math.rsqrt %29 : vector<1x128xf32>
    %31 = vector.broadcast %30 : vector<1x128xf32> to vector<16x128xf32>
    %32 = arith.mulf %27, %31 : vector<16x128xf32>
    %c0_13 = arith.constant 0 : index
    %c0_14 = arith.constant 0 : index
    %33 = vector.load %arg4[%c0_13, %c0_14] : memref<16x128xf32, #tpu.memory_space<vmem>>, vector<16x128xf32>
    tpu.vector_store %arg4[%c0_13, %c0_14], %32 {strides = array<i32>} : memref<16x128xf32, #tpu.memory_space<vmem>>, vector<16x128xf32>,
    return
  }
  func.func @transform_0(%arg0: i32) -> (i32, i32) {
    %c0_i32 = arith.constant 0 : i32
    %c0_i32_0 = arith.constant 0 : i32
    %c0_i32_1 = arith.constant 0 : i32
    return %c0_i32, %c0_i32_0 : i32, i32
  }
  func.func @transform_1(%arg0: i32) -> (i32, i32) {
    %c0_i32 = arith.constant 0 : i32
    %c0_i32_0 = arith.constant 0 : i32
    return %c0_i32, %arg0 : i32, i32
  }
  func.func @transform_2(%arg0: i32) -> (i32, i32) {
    %c0_i32 = arith.constant 0 : i32
    %c0_i32_0 = arith.constant 0 : i32
    return %c0_i32, %arg0 : i32, i32
  }
  func.func @transform_3(%arg0: i32) -> (i32, i32) {
    %c0_i32 = arith.constant 0 : i32
    %c0_i32_0 = arith.constant 0 : i32
    return %c0_i32, %arg0 : i32, i32
  }
}

</mosaic_0001>

<llo_original>
// kernel: tpu_custom_call.1
$region0: #{tpu_custom_call.1}
  #allocation0 [shape = 'u32[]', space=smem, size = 0x4, offset = 0x4, fixed_abs, tag = 'smem constant byte address 0x4 - core index']
  #allocation1 [shape = 'u32[72,128]{1,0:T(1,128)}', space=vmem, size = 0x9000, scoped, tag = 'internal scratch']
  %s0 = inlined_call_operand.hbm [shape: bf16[16,128], index: 0, kind: input, shape index: {}]
  %s1 = inlined_call_operand.hbm [shape: bf16[128,128], index: 1, kind: input, shape index: {}]
  %s2 = inlined_call_operand.vmem [shape: f32[1,128], index: 2, kind: input, shape index: {}]
  %s3 = inlined_call_operand.hbm [shape: f32[16,128], index: 3, kind: output, shape index: {}]
  %s4 = sld [smem:[#allocation0]]
  $region30: #{tpu_custom_call.1} parent=0
    _
  %s6 = ssub.s32 1, %s4
  %s7 = scalar_select 0, %s6, %s4
  $region1: #{tpu_custom_call.1} parent=0
    #allocation2 [shape = 'u8[4096]{0}', space=vmem, size = 0x1000, scoped, tag = 'input window, operand 0, single buffered']
    #allocation3 [shape = 's32[1]{0}', space=sflag, size = 0x4, scoped, tag = 'scoped memory for tpu_custom_call.1']
    #allocation4 [shape = 's32[1]{0}', space=sflag, size = 0x4, scoped, tag = 'scoped memory for tpu_custom_call.1']
    #allocation5 [shape = 'u8[32768]{0}', space=vmem, size = 0x8000, scoped, tag = 'input window, operand 1, single buffered']
    #allocation6 [shape = 's32[1]{0}', space=sflag, size = 0x4, scoped, tag = 'scoped memory for tpu_custom_call.1']
    #allocation7 [shape = 'u8[8192]{0}', space=vmem, size = 0x2000, scoped, tag = 'output window, operand 0, single buffered']
    %8 = vsyncpa [#allocation3], 0
    %9 = vsyncpa [#allocation6], 0
    %10 = vsyncpa [#allocation4], 0
    // Predicated region
    $region2: #{tpu_custom_call.1} parent=1 // pred_check
      _
    $region3: #{tpu_custom_call.1} parent=1 // pred_check_branch
      %12 = sbr.rel (0) target = $region5
    $region4: #{tpu_custom_call.1} parent=1 // pred_region
      %14 = vsyncadd [#allocation3], 0
      %s15 = sshll.u32 %s0, 4
      %s16 = int_to_ptr.hbm [resolvable:$true] %s15
      %s17 = sshll.u32 [#allocation2], 4
      %s18 = int_to_ptr.vmem [resolvable:$true] %s17
      %23 = dma.hbm_to_vmem [thread:$0]  %s16, 128, %s18, [#allocation3], 64, 64, 4
    $region5: #{tpu_custom_call.1} parent=1 // pred_fallthru
      _
    // Predicated region
    $region6: #{tpu_custom_call.1} parent=1 // pred_check
      _
    $region7: #{tpu_custom_call.1} parent=1 // pred_check_branch
      %25 = sbr.rel (0) target = $region9
    $region8: #{tpu_custom_call.1} parent=1 // pred_region
      %27 = vsyncadd [#allocation6], 0
      %s28 = sshll.u32 %s1, 4
      %s29 = int_to_ptr.hbm [resolvable:$true] %s28
      %s30 = sshll.u32 [#allocation5], 4
      %s31 = int_to_ptr.vmem [resolvable:$true] %s30
      %36 = dma.hbm_to_vmem [thread:$0]  %s29, 1024, %s31, [#allocation6], 64, 64, 4
    $region9: #{tpu_custom_call.1} parent=1 // pred_fallthru
      _
    // Predicated region
    $region10: #{tpu_custom_call.1} parent=1 // pred_check
      _
    $region11: #{tpu_custom_call.1} parent=1 // pred_check_branch
      %38 = sbr.rel (0) target = $region13
    $region12: #{tpu_custom_call.1} parent=1 // pred_region
      _
    $region13: #{tpu_custom_call.1} parent=1 // pred_fallthru
      _
    // Predicated region
    $region14: #{tpu_custom_call.1} parent=1 // pred_check
      _
    $region15: #{tpu_custom_call.1} parent=1 // pred_check_branch
      %40 = sbr.rel (0) target = $region17
    $region16: #{tpu_custom_call.1} parent=1 // pred_region
      %42 = dma.done [#allocation3], 128
    $region17: #{tpu_custom_call.1} parent=1 // pred_fallthru
      _
    // Predicated region
    $region18: #{tpu_custom_call.1} parent=1 // pred_check
      _
    $region19: #{tpu_custom_call.1} parent=1 // pred_check_branch
      %44 = sbr.rel (0) target = $region21
    $region20: #{tpu_custom_call.1} parent=1 // pred_region
      %46 = dma.done [#allocation6], 1024
    $region21: #{tpu_custom_call.1} parent=1 // pred_fallthru
      _
    %v47 = vld [vmem:[#allocation2] sm:$0xf]
    %v48 = vld [vmem:[#allocation2 + $0x4] sm:$0xf]
    %v49 = vld [vmem:[#allocation5] sm:$0xf]
    %v50 = vld [vmem:[#allocation5 + $0x4] sm:$0xf]
    %v51 = vld [vmem:[#allocation5 + $0x8] sm:$0xf]
    %v52 = vld [vmem:[#allocation5 + $0xc] sm:$0xf]
    %v53 = vld [vmem:[#allocation5 + $0x10] sm:$0xf]
    %v54 = vld [vmem:[#allocation5 + $0x14] sm:$0xf]
    %v55 = vld [vmem:[#allocation5 + $0x18] sm:$0xf]
    %v56 = vld [vmem:[#allocation5 + $0x1c] sm:$0xf]
    %v57 = vld [vmem:[#allocation5 + $0x20] sm:$0xf]
    %v58 = vld [vmem:[#allocation5 + $0x24] sm:$0xf]
    %v59 = vld [vmem:[#allocation5 + $0x28] sm:$0xf]
    %v60 = vld [vmem:[#allocation5 + $0x2c] sm:$0xf]
    %v61 = vld [vmem:[#allocation5 + $0x30] sm:$0xf]
    %v62 = vld [vmem:[#allocation5 + $0x34] sm:$0xf]
    %v63 = vld [vmem:[#allocation5 + $0x38] sm:$0xf]
    %v64 = vld [vmem:[#allocation5 + $0x3c] sm:$0xf]
    %v65 = vld [vmem:[%s2] sm:$0x1]
    %v67 = vperm.slane %v65, 0
    %v71 = vunpack.c.l.b16 %v47
    %v72 = vunpack.c.l.b16 %v48
    %v73 = vpack.c.b16 %v72, %v71
    %v91 = vunpack.c.l.b16 %v49
    %v92 = vunpack.c.l.b16 %v50
    %v93 = vunpack.c.l.b16 %v51
    %v94 = vunpack.c.l.b16 %v52
    %v95 = vunpack.c.l.b16 %v53
    %v96 = vunpack.c.l.b16 %v54
    %v97 = vunpack.c.l.b16 %v55
    %v98 = vunpack.c.l.b16 %v56
    %v99 = vunpack.c.l.b16 %v57
    %v100 = vunpack.c.l.b16 %v58
    %v101 = vunpack.c.l.b16 %v59
    %v102 = vunpack.c.l.b16 %v60
    %v103 = vunpack.c.l.b16 %v61
    %v104 = vunpack.c.l.b16 %v62
    %v105 = vunpack.c.l.b16 %v63
    %v106 = vunpack.c.l.b16 %v64
    %v107 = vpack.c.b16 %v92, %v91
    %v108 = vpack.c.b16 %v94, %v93
    %v109 = vpack.c.b16 %v96, %v95
    %v110 = vpack.c.b16 %v98, %v97
    %v111 = vpack.c.b16 %v100, %v99
    %v112 = vpack.c.b16 %v102, %v101
    %v113 = vpack.c.b16 %v104, %v103
    %v114 = vpack.c.b16 %v106, %v105
    %123 = vmatpush.bf16.msra.mxu0 %v114
    %124 = vmatpush.bf16.msra.mxu0 %v113
    %125 = vmatpush.bf16.msra.mxu0 %v112
    %126 = vmatpush.bf16.msra.mxu0 %v111
    %127 = vmatpush.bf16.msra.mxu0 %v110
    %128 = vmatpush.bf16.msra.mxu0 %v109
    %129 = vmatpush.bf16.msra.mxu0 %v108
    %130 = vmatpush.bf16.msra.mxu0 %v107
    %131 = vmatmul.bf16.gmra.mxu0 %v73
    %v132 = vpop.f32.mrf.mxu0
    %v133 = vadd.f32 %v67, %v132
    %v134 = vpop.f32.mrf.mxu0
    %v135 = vadd.f32 %v67, %v134
    %136 = vdwg.mxu0
    %v137 = vmax.f32 %v133, 0.0
    %v138 = vmax.f32 %v135, 0.0
    %v139 = vlaneseq
    %v140 = vshrl.u32 %v139, 7
    %v141 = vadd.s32 %v140, 8
    %vm142 = vcmp.lt.s32.totalorder %v140, 8
    %vm143 = vcmp.lt.s32.totalorder %v141, 8
    %v144 = vsel %vm142, %v137, 0.0
    %v145 = vsel %vm143, %v138, 0.0
    %v146 = vadd.f32 %v144, %v145
    %v147 = vrot.slane %v146, 4
    %v148 = vadd.f32 %v146, %v147
    %v149 = vrot.slane %v148, 2
    %v150 = vadd.f32 %v148, %v149
    %v151 = vrot.slane %v150, 1
    %v152 = vadd.f32 %v150, %v151
    %v153 = vmul.f32 %v152, 0.125
    %v154 = vmul.f32 %v144, %v144
    %v155 = vmul.f32 %v145, %v145
    %v156 = vadd.f32 %v154, %v155
    %v157 = vrot.slane %v156, 4
    %v158 = vadd.f32 %v156, %v157
    %v159 = vrot.slane %v158, 2
    %v160 = vadd.f32 %v158, %v159
    %v161 = vrot.slane %v160, 1
    %v162 = vadd.f32 %v160, %v161
    %v163 = vmul.f32 %v162, 0.125
    %v164 = vmul.f32 %v153, %v153
    %v165 = vsub.f32 %v163, %v164
    %v166 = vmax.f32 %v165, 0.0
    %v167 = vsub.f32 %v144, %v153
    %v168 = vsub.f32 %v145, %v153
    %v169 = vadd.f32 %v166, 1e-05
    %v170 = vrsqrt.pop %v169
    %v171 = vmul.f32 %v170, %v169
    %v172 = vmul.f32 %v171, %v170
    %v173 = vmul.f32 0.5, %v172
    %v174 = vsub.f32 1.5, %v173
    %v175 = vmul.f32 %v170, %v174
    %vm176 = vweird.f32 %v169
    %vm177 = vweird.f32 %v170
    %vm178 = vmor %vm176, %vm177
    %v179 = vsel %vm178, %v170, %v175
    %v180 = vmul.f32 %v167, %v179
    %v181 = vmul.f32 %v168, %v179
    %182 = vst [vmem:[#allocation7] sm:$0xff] %v180
    %183 = vst [vmem:[#allocation7 + $0x8] sm:$0xff] %v181
    // Predicated region
    $region22: #{tpu_custom_call.1} parent=1 // pred_check
      _
    $region23: #{tpu_custom_call.1} parent=1 // pred_check_branch
      %185 = sbr.rel (0) target = $region25
    $region24: #{tpu_custom_call.1} parent=1 // pred_region
      %187 = vsyncadd [#allocation4], 0
      %s188 = sshll.u32 [#allocation7], 4
      %s189 = int_to_ptr.vmem [resolvable:$true] %s188
      %s190 = sshll.u32 %s3, 4
      %s191 = int_to_ptr.hbm [resolvable:$true] %s190
      %196 = dma.vmem_to_hbm [thread:$0]  %s189, 256, %s191, [#allocation4], 128, 128, 8
    $region25: #{tpu_custom_call.1} parent=1 // pred_fallthru
      _
    // Predicated region
    $region26: #{tpu_custom_call.1} parent=1 // pred_check
      _
    $region27: #{tpu_custom_call.1} parent=1 // pred_check_branch
      %198 = sbr.rel (0) target = $region29
    $region28: #{tpu_custom_call.1} parent=1 // pred_region
      %200 = dma.done [#allocation4], 256
    $region29: #{tpu_custom_call.1} parent=1 // pred_fallthru
      _
    %201 = vsyncpa [#allocation3], 1
    %202 = vsyncpa [#allocation6], 1
    %203 = vsyncpa [#allocation4], 1

</llo_original>
